<compile_context>
chip_gen: v6e
topology: v6e:2x2x1
jax: 0.10.0
libtpu: 0.0.40
codegen_flags: <defaults>
</compile_context>

<pallas_src>
import math

import jax
import jax.numpy as jnp
from jax.experimental import pallas as pl
from jax.experimental.pallas import tpu as pltpu


_MAX_ROW_TILE = 2048   # rows per grid step (multiple of 8); 2048 x 512 f32 = 4 MiB/buffer
_LANE_CANDIDATES = (512, 256, 128)


def _cdiv(a, b):
    return -(-a // b)


def _detect_num_tensorcores() -> int:
    """Best-effort TensorCore count; megacore split only pays off on multi-TC chips."""
    try:
        info = pltpu.get_tpu_info()
    except Exception:
        return 1
    for attr in ("num_cores", "num_tensorcores", "tensorcore_count", "core_count",
                 "cores_per_chip"):
        v = getattr(info, attr, None)
        if isinstance(v, int) and 1 <= v <= 8:
            return v
    return 1


def _make_kernel(row_tile, lanes, tiles_per_split, rows, need_row_mask):
    regular = (row_tile % 8 == 0)

    def kernel(alpha_ref, mean_ref, logvar_ref, target_ref, output_ref, out_ref, acc_ref):
        c = pl.program_id(0)   # megacore split ("parallel")
        t = pl.program_id(1)   # reduction over image tiles ("arbitrary")

        @pl.when(t == 0)
        def _init():
            acc_ref[...] = jnp.zeros_like(acc_ref)

        # --- MSE partial: squared diff, folded into a lane-dense (8, lanes) acc ---
        diff = output_ref[...].astype(jnp.float32) - target_ref[...].astype(jnp.float32)
        sq = diff * diff

        if need_row_mask:
            # Boundary block: rows beyond the valid range hold unspecified data;
            # zero them before the reduction (rows is a static Python int).
            gb = c * tiles_per_split + t
            row_in_tile = jax.lax.broadcasted_iota(jnp.int32, sq.shape, 0)
            sq = jnp.where(gb * row_tile + row_in_tile < rows, sq, jnp.float32(0.0))

        if regular:
            # tile-aligned reshape (no relayout) + pure-VPU vreg folds
            acc_ref[...] += sq.reshape(row_tile // 8, 8, lanes).sum(axis=0)
        else:
            # tiny-input path (rows < 8): single full reduce into acc[0, 0]
            sub = jax.lax.broadcasted_iota(jnp.int32, (8, lanes), 0)
            lan = jax.lax.broadcasted_iota(jnp.int32, (8, lanes), 1)
            acc_ref[...] += jnp.where((sub == 0) & (lan == 0), jnp.sum(sq),
                                      jnp.float32(0.0))

        # --- epilogue: one XLU reduce of the accumulator, KL only on split 0 ---
        @pl.when(t == tiles_per_split - 1)
        def _finalize():
            mse_part = jnp.sum(acc_ref[...])
            out_lane = jax.lax.broadcasted_iota(jnp.int32, (8, 128), 1)

            @pl.when(c == 0)
            def _with_kl():
                lv = logvar_ref[...].astype(jnp.float32)
                mn = mean_ref[...].astype(jnp.float32)
                lv2 = lv * lv
                # TODO(synk): log(logvar^2) is -inf if logvar == 0 exactly; the torch
                # reference has the same behavior, so no epsilon clamp is added here.
                kl = jnp.sum(lv2 + mn * mn - jnp.log(lv2) - jnp.float32(0.5)) * alpha_ref[0]
                out_ref[0] = jnp.where(out_lane == 0, kl,
                             jnp.where(out_lane == 1, mse_part,
                             jnp.where(out_lane == 2, kl + mse_part, jnp.float32(0.0))))

            @pl.when(c != 0)
            def _mse_only():
                out_ref[0] = jnp.where(out_lane == 1, mse_part, jnp.float32(0.0))

    return kernel


def klmse_loss(target, output, mean, logvar, kl_alpha: float = 0.1, *,
               max_row_tile: int = _MAX_ROW_TILE, nsplit: int | None = None):
    """Returns (kl, mse, total) float32 scalars, matching KLMSE_Loss.forward."""
    assert target.shape == output.shape
    assert mean.shape == logvar.shape

    # Latent tensors: small, kept resident in VMEM as one full-array block.
    if mean.ndim >= 2:
        mean2d = mean.reshape(mean.shape[0], -1)
    else:
        mean2d = mean.reshape(1, -1)
    logvar2d = logvar.reshape(mean2d.shape)

    # --- image tensors -> lane-dense (rows, lanes) slab, zero-copy when possible ---
    total = math.prod(target.shape)
    lanes = None
    for cand in _LANE_CANDIDATES:                      # prefer rows >= 8 (regular path)
        if total % cand == 0 and total // cand >= 8:
            lanes = cand
            break
    if lanes is None:
        for cand in _LANE_CANDIDATES:
            if total % cand == 0:
                lanes = cand
                break
    if lanes is None:
        lanes = 128

    if total % lanes == 0:
        rows = total // lanes

        def to_slab(x):
            return jnp.ravel(x).reshape(rows, lanes)   # pure reshape, no HBM copy
    else:
        # TODO(synk): element count not a multiple of 128 -> a (full-copy) zero-pad is
        # unavoidable to form a rectangular slab; pad diff is 0 so MSE is unaffected.
        padded_total = _cdiv(total, lanes) * lanes
        rows = padded_total // lanes

        def to_slab(x):
            return jnp.pad(jnp.ravel(x), (0, padded_total - total)).reshape(rows, lanes)

    if rows >= 8:
        row_tile = min(max(8, max_row_tile), (rows // 8) * 8)
        row_tile = max(8, (row_tile // 8) * 8)         # multiple of 8, <= rows
    else:
        row_tile = rows                                # tiny input: one full-dim block
    tiles_total = _cdiv(rows, row_tile)
    need_row_mask = (rows % row_tile) != 0             # boundary block masked in-kernel

    if nsplit is None:
        nsplit = _detect_num_tensorcores()
    if nsplit > 1 and tiles_total % nsplit == 0:       # no fully-OOB blocks allowed
        tiles_per_split = tiles_total // nsplit
    else:
        nsplit = 1
        tiles_per_split = tiles_total

    tgt_slab = to_slab(target)
    out_slab = to_slab(output)
    alpha = jnp.asarray([kl_alpha], dtype=jnp.float32)     # 1-D SMEM scalar

    img_spec = pl.BlockSpec((row_tile, lanes),
                            lambda c, t: (c * tiles_per_split + t, 0))
    latent_spec = pl.BlockSpec(mean2d.shape, lambda c, t: (0, 0))

    # 2 streamed inputs x 2 pipeline buffers per input, plus generous headroom;
    # keeps 2048-row tiles legal on v5e's 16 MiB scoped default as well.
    tile_bytes = row_tile * lanes * jnp.dtype(target.dtype).itemsize
    vmem_limit = int(min(max(4 * tile_bytes + (8 << 20), 16 << 20), 56 << 20))

    kernel = _make_kernel(row_tile, lanes, tiles_per_split, rows, need_row_mask)

    partials = pl.pallas_call(
        kernel,
        out_shape=jax.ShapeDtypeStruct((nsplit, 8, 128), jnp.float32),
        grid=(nsplit, tiles_per_split),
        in_specs=[
            pl.BlockSpec(memory_space=pltpu.SMEM),   # kl_alpha (runtime scalar)
            latent_spec,                             # mean   (resident in VMEM)
            latent_spec,                             # logvar (resident in VMEM)
            img_spec,                                # target (pipelined tiles)
            img_spec,                                # output (pipelined tiles)
        ],
        out_specs=pl.BlockSpec((1, 8, 128), lambda c, t: (c, 0, 0)),
        scratch_shapes=[pltpu.VMEM((8, lanes), jnp.float32)],
        compiler_params=pltpu.CompilerParams(
            dimension_semantics=("parallel", "arbitrary"),
            vmem_limit_bytes=vmem_limit),
    )(alpha, mean2d, logvar2d, tgt_slab, out_slab)

    kl = jnp.sum(partials[:, 0, 0])
    mse = jnp.sum(partials[:, 0, 1])
    return kl, mse, kl + mse


def _reference(target, output, mean, logvar, kl_alpha=0.1):
    lv2 = logvar.astype(jnp.float32) ** 2
    kl = jnp.sum(lv2 + mean.astype(jnp.float32) ** 2 - jnp.log(lv2) - 0.5) * kl_alpha
    mse = jnp.sum((output.astype(jnp.float32) - target.astype(jnp.float32)) ** 2)
    return kl, mse, kl + mse


def _check(got, want, rtol=1e-4, atol=1e-2):
    for g, w in zip(got, want):
        assert jnp.allclose(g, w, rtol=rtol, atol=atol), (g, w)


if __name__ == "__main__":
    key = jax.random.PRNGKey(0)
    ks = jax.random.split(key, 12)

    mean = jax.random.normal(ks[0], (2, 32), dtype=jnp.float32)
    # keep logvar away from 0 so log(logvar^2) is finite (as the torch module assumes)
    logvar = jax.random.normal(ks[1], (2, 32), dtype=jnp.float32) * 0.5 + 1.5

    # Case 1: module-consistent shapes (images NCHW, latents (N, Z)); zero-copy reshape.
    t1 = jax.random.normal(ks[2], (2, 4, 16, 16), dtype=jnp.float32)
    o1 = jax.random.normal(ks[3], (2, 4, 16, 16), dtype=jnp.float32)
    got = klmse_loss(t1, o1, mean, logvar, kl_alpha=0.1)
    jax.block_until_ready(got)
    _check(got, _reference(t1, o1, mean, logvar, 0.1))

    # Case 2: odd spatial size -> rare pad fallback; small tiles + explicit nsplit=2
    # exercise multi-tile accumulation and the MSE-only (c > 0) epilogue branch.
    t2 = jax.random.normal(ks[4], (2, 4, 31, 33), dtype=jnp.float32)
    o2 = jax.random.normal(ks[5], (2, 4, 31, 33), dtype=jnp.float32)
    got = klmse_loss(t2, o2, mean, logvar, kl_alpha=0.25, max_row_tile=16, nsplit=2)
    jax.block_until_ready(got)
    _check(got, _reference(t2, o2, mean, logvar, 0.25))

    # Case 3: zero-copy reshape with ragged row count -> in-kernel boundary masking.
    t3 = jax.random.normal(ks[6], (2, 4, 16, 24), dtype=jnp.float32)
    o3 = jax.random.normal(ks[7], (2, 4, 16, 24), dtype=jnp.float32)
    got = klmse_loss(t3, o3, mean, logvar, kl_alpha=0.1, max_row_tile=8)
    jax.block_until_ready(got)
    _check(got, _reference(t3, o3, mean, logvar, 0.1))

    # Case 4: bf16 images stream as bf16 (half HBM bytes), upcast per tile in-kernel.
    t4 = jax.random.normal(ks[8], (4, 4, 32, 32), dtype=jnp.bfloat16)
    o4 = jax.random.normal(ks[9], (4, 4, 32, 32), dtype=jnp.bfloat16)
    got = klmse_loss(t4, o4, mean, logvar, kl_alpha=0.1)
    jax.block_until_ready(got)
    _check(got, _reference(t4, o4, mean, logvar, 0.1))

    # Case 5: tiny input (rows < 8) exercises the irregular single-block path.
    t5 = jax.random.normal(ks[10], (1, 4, 8, 16), dtype=jnp.float32)
    o5 = jax.random.normal(ks[11], (1, 4, 8, 16), dtype=jnp.float32)
    got = klmse_loss(t5, o5, mean, logvar, kl_alpha=0.3)
    jax.block_until_ready(got)
    _check(got, _reference(t5, o5, mean, logvar, 0.3))

    print("KERNEL_OK")
</pallas_src>

<mosaic_0001>
module attributes {stable_mosaic.version = 11 : i64} {
  func.func @kernel(%arg0: i32, %arg1: i32, %arg2: memref<1xf32, #tpu.memory_space<smem>>, %arg3: memref<2x32xf32, #tpu.memory_space<vmem>>, %arg4: memref<2x32xf32, #tpu.memory_space<vmem>>, %arg5: memref<8x256xf32, #tpu.memory_space<vmem>>, %arg6: memref<8x256xf32, #tpu.memory_space<vmem>>, %arg7: memref<1x8x128xf32, #tpu.memory_space<vmem>>, %arg8: memref<8x256xf32, #tpu.memory_space<vmem>>) attributes {dimension_semantics = [#tpu.dimension_semantics<parallel>, #tpu.dimension_semantics<arbitrary>], iteration_bounds = array<i64: 1, 1>, scalar_prefetch = 0 : i64, scratch_operands = 1 : i64, tpu.core_type = #tpu.core_type<tc>, window_params = [{transform_indices = @transform_0, window_bounds = array<i64: 1>}, {pipeline_mode = #tpu.pipeline_mode<synchronous>, transform_indices = @transform_1, window_bounds = array<i64: 2, 32>}, {pipeline_mode = #tpu.pipeline_mode<synchronous>, transform_indices = @transform_2, window_bounds = array<i64: 2, 32>}, {transform_indices = @transform_3, window_bounds = array<i64: 8, 256>}, {transform_indices = @transform_4, window_bounds = array<i64: 8, 256>}, {transform_indices = @transform_5, window_bounds = array<i64: 1, 8, 128>}]} {
    %c0_i32 = arith.constant 0 : i32
    %0 = arith.cmpi eq, %arg1, %c0_i32 : i32
    %1 = arith.extui %0 : i1 to i32
    %c0_i32_0 = arith.constant 0 : i32
    %2 = arith.cmpi ne, %1, %c0_i32_0 : i32
    scf.if %2 {
      %cst_10 = arith.constant 0.000000e+00 : f32
      %15 = vector.broadcast %cst_10 : f32 to vector<8x256xf32>
      %c0_11 = arith.constant 0 : index
      %c0_12 = arith.constant 0 : index
      %16 = vector.load %arg8[%c0_11, %c0_12] : memref<8x256xf32, #tpu.memory_space<vmem>>, vector<8x256xf32>
      tpu.vector_store %arg8[%c0_11, %c0_12], %15 {strides = array<i32>} : memref<8x256xf32, #tpu.memory_space<vmem>>, vector<8x256xf32>,
    } else {
    }
    %c0 = arith.constant 0 : index
    %c0_1 = arith.constant 0 : index
    %3 = vector.load %arg6[%c0, %c0_1] : memref<8x256xf32, #tpu.memory_space<vmem>>, vector<8x256xf32>
    %c0_2 = arith.constant 0 : index
    %c0_3 = arith.constant 0 : index
    %4 = vector.load %arg5[%c0_2, %c0_3] : memref<8x256xf32, #tpu.memory_space<vmem>>, vector<8x256xf32>
    %5 = arith.subf %3, %4 : vector<8x256xf32>
    %6 = arith.mulf %5, %5 : vector<8x256xf32>
    %c0_4 = arith.constant 0 : index
    %c0_5 = arith.constant 0 : index
    %7 = vector.load %arg8[%c0_4, %c0_5] : memref<8x256xf32, #tpu.memory_space<vmem>>, vector<8x256xf32>
    %8 = vector.shape_cast %6 : vector<8x256xf32> to vector<1x8x256xf32>
    %cst = arith.constant dense<0.000000e+00> : vector<8x256xf32>
    %9 = vector.multi_reduction <add>, %8, %cst [0] : vector<1x8x256xf32> to vector<8x256xf32>
    %10 = arith.addf %7, %9 : vector<8x256xf32>
    %c0_6 = arith.constant 0 : index
    %c0_7 = arith.constant 0 : index
    %11 = vector.load %arg8[%c0_6, %c0_7] : memref<8x256xf32, #tpu.memory_space<vmem>>, vector<8x256xf32>
    tpu.vector_store %arg8[%c0_6, %c0_7], %10 {strides = array<i32>} : memref<8x256xf32, #tpu.memory_space<vmem>>, vector<8x256xf32>,
    %c0_i32_8 = arith.constant 0 : i32
    %12 = arith.cmpi eq, %arg1, %c0_i32_8 : i32
    %13 = arith.extui %12 : i1 to i32
    %c0_i32_9 = arith.constant 0 : i32
    %14 = arith.cmpi ne, %13, %c0_i32_9 : i32
    scf.if %14 {
      %c0_10 = arith.constant 0 : index
      %c0_11 = arith.constant 0 : index
      %15 = vector.load %arg8[%c0_10, %c0_11] : memref<8x256xf32, #tpu.memory_space<vmem>>, vector<8x256xf32>
      %16 = vector.shape_cast %15 : vector<8x256xf32> to vector<1x8x256xf32>
      %cst_12 = arith.constant dense<0.000000e+00> : vector<1xf32>
      %17 = vector.multi_reduction <add>, %16, %cst_12 [1, 2] : vector<1x8x256xf32> to vector<1xf32>
      %18 = vector.shape_cast %17 : vector<1xf32> to vector<1x1x1xf32>
      %19 = vector.extract %18[0, 0, 0] : f32 from vector<1x1x1xf32>
      %20 = tpu.iota {dimensions = array<i32: 1>} : vector<8x128xi32>
      %c0_i32_13 = arith.constant 0 : i32
      %21 = arith.cmpi eq, %arg0, %c0_i32_13 : i32
      %22 = arith.extui %21 : i1 to i32
      %c0_i32_14 = arith.constant 0 : i32
      %23 = arith.cmpi ne, %22, %c0_i32_14 : i32
      scf.if %23 {
        %c0_17 = arith.constant 0 : index
        %c0_18 = arith.constant 0 : index
        %27 = vector.load %arg4[%c0_17, %c0_18] : memref<2x32xf32, #tpu.memory_space<vmem>>, vector<2x32xf32>
        %c0_19 = arith.constant 0 : index
        %c0_20 = arith.constant 0 : index
        %28 = vector.load %arg3[%c0_19, %c0_20] : memref<2x32xf32, #tpu.memory_space<vmem>>, vector<2x32xf32>
        %29 = arith.mulf %27, %27 : vector<2x32xf32>
        %30 = arith.mulf %28, %28 : vector<2x32xf32>
        %31 = arith.addf %29, %30 : vector<2x32xf32>
        %32 = math.log %29 : vector<2x32xf32>
        %33 = arith.subf %31, %32 : vector<2x32xf32>
        %cst_21 = arith.constant 5.000000e-01 : f32
        %34 = vector.broadcast %cst_21 : f32 to vector<2x32xf32>
        %35 = arith.subf %33, %34 : vector<2x32xf32>
        %36 = vector.shape_cast %35 : vector<2x32xf32> to vector<1x2x32xf32>
        %cst_22 = arith.constant dense<0.000000e+00> : vector<1xf32>
        %37 = vector.multi_reduction <add>, %36, %cst_22 [1, 2] : vector<1x2x32xf32> to vector<1xf32>
        %38 = vector.shape_cast %37 : vector<1xf32> to vector<1x1x1xf32>
        %39 = vector.extract %38[0, 0, 0] : f32 from vector<1x1x1xf32>
        %c0_23 = arith.constant 0 : index
        %40 = memref.load %arg2[%c0_23] : memref<1xf32, #tpu.memory_space<smem>>
        %41 = arith.mulf %39, %40 : f32
        %c0_i32_24 = arith.constant 0 : i32
        %42 = vector.broadcast %c0_i32_24 : i32 to vector<8x128xi32>
        %43 = arith.cmpi eq, %20, %42 : vector<8x128xi32>
        %c1_i32 = arith.constant 1 : i32
        %44 = vector.broadcast %c1_i32 : i32 to vector<8x128xi32>
        %45 = arith.cmpi eq, %20, %44 : vector<8x128xi32>
        %c2_i32 = arith.constant 2 : i32
        %46 = vector.broadcast %c2_i32 : i32 to vector<8x128xi32>
        %47 = arith.cmpi eq, %20, %46 : vector<8x128xi32>
        %48 = arith.addf %41, %19 : f32
        %cst_25 = arith.constant 0.000000e+00 : f32
        %49 = vector.broadcast %48 : f32 to vector<8x128xf32>
        %50 = vector.broadcast %cst_25 : f32 to vector<8x128xf32>
        %51 = arith.select %47, %49, %50 : vector<8x128xi1>, vector<8x128xf32>
        %52 = vector.broadcast %19 : f32 to vector<8x128xf32>
        %53 = arith.select %45, %52, %51 : vector<8x128xi1>, vector<8x128xf32>
        %54 = vector.broadcast %41 : f32 to vector<8x128xf32>
        %55 = arith.select %43, %54, %53 : vector<8x128xi1>, vector<8x128xf32>
        %c0_26 = arith.constant 0 : index
        %c0_27 = arith.constant 0 : index
        %c0_28 = arith.constant 0 : index
        %56 = vector.load %arg7[%c0_26, %c0_27, %c0_28] : memref<1x8x128xf32, #tpu.memory_space<vmem>>, vector<1x8x128xf32>
        %57 = vector.shape_cast %56 : vector<1x8x128xf32> to vector<8x128xf32>
        %58 = vector.shape_cast %55 : vector<8x128xf32> to vector<1x8x128xf32>
        tpu.vector_store %arg7[%c0_26, %c0_27, %c0_28], %58 {strides = array<i32>} : memref<1x8x128xf32, #tpu.memory_space<vmem>>, vector<1x8x128xf32>,
      } else {
      }
      %c0_i32_15 = arith.constant 0 : i32
      %24 = arith.cmpi ne, %arg0, %c0_i32_15 : i32
      %25 = arith.extui %24 : i1 to i32
      %c0_i32_16 = arith.constant 0 : i32
      %26 = arith.cmpi ne, %25, %c0_i32_16 : i32
      scf.if %26 {
        %c1_i32 = arith.constant 1 : i32
        %27 = vector.broadcast %c1_i32 : i32 to vector<8x128xi32>
        %28 = arith.cmpi eq, %20, %27 : vector<8x128xi32>
        %cst_17 = arith.constant 0.000000e+00 : f32
        %29 = vector.broadcast %19 : f32 to vector<8x128xf32>
        %30 = vector.broadcast %cst_17 : f32 to vector<8x128xf32>
        %31 = arith.select %28, %29, %30 : vector<8x128xi1>, vector<8x128xf32>
        %c0_18 = arith.constant 0 : index
        %c0_19 = arith.constant 0 : index
        %c0_20 = arith.constant 0 : index
        %32 = vector.load %arg7[%c0_18, %c0_19, %c0_20] : memref<1x8x128xf32, #tpu.memory_space<vmem>>, vector<1x8x128xf32>
        %33 = vector.shape_cast %32 : vector<1x8x128xf32> to vector<8x128xf32>
        %34 = vector.shape_cast %31 : vector<8x128xf32> to vector<1x8x128xf32>
        tpu.vector_store %arg7[%c0_18, %c0_19, %c0_20], %34 {strides = array<i32>} : memref<1x8x128xf32, #tpu.memory_space<vmem>>, vector<1x8x128xf32>,
      } else {
      }
    } else {
    }
    return
  }
  func.func @transform_0(%arg0: i32, %arg1: i32) -> i32 {
    %c0_i32 = arith.constant 0 : i32
    %c0_i32_0 = arith.constant 0 : i32
    return %c0_i32 : i32
  }
  func.func @transform_1(%arg0: i32, %arg1: i32) -> (i32, i32) {
    %c0_i32 = arith.constant 0 : i32
    %c0_i32_0 = arith.constant 0 : i32
    %c0_i32_1 = arith.constant 0 : i32
    return %c0_i32, %c0_i32_0 : i32, i32
  }
  func.func @transform_2(%arg0: i32, %arg1: i32) -> (i32, i32) {
    %c0_i32 = arith.constant 0 : i32
    %c0_i32_0 = arith.constant 0 : i32
    %c0_i32_1 = arith.constant 0 : i32
    return %c0_i32, %c0_i32_0 : i32, i32
  }
  func.func @transform_3(%arg0: i32, %arg1: i32) -> (i32, i32) {
    %c1_i32 = arith.constant 1 : i32
    %0 = arith.muli %arg0, %c1_i32 : i32
    %1 = arith.addi %0, %arg1 : i32
    %c0_i32 = arith.constant 0 : i32
    %c0_i32_0 = arith.constant 0 : i32
    return %1, %c0_i32 : i32, i32
  }
  func.func @transform_4(%arg0: i32, %arg1: i32) -> (i32, i32) {
    %c1_i32 = arith.constant 1 : i32
    %0 = arith.muli %arg0, %c1_i32 : i32
    %1 = arith.addi %0, %arg1 : i32
    %c0_i32 = arith.constant 0 : i32
    %c0_i32_0 = arith.constant 0 : i32
    return %1, %c0_i32 : i32, i32
  }
  func.func @transform_5(%arg0: i32, %arg1: i32) -> (i32, i32, i32) {
    %c0_i32 = arith.constant 0 : i32
    %c0_i32_0 = arith.constant 0 : i32
    %c0_i32_1 = arith.constant 0 : i32
    return %arg0, %c0_i32, %c0_i32_0 : i32, i32, i32
  }
}

</mosaic_0001>

<llo_original>
// kernel: tpu_custom_call.1
$region0: #{tpu_custom_call.1}
  #allocation0 [shape = 'u32[]', space=smem, size = 0x4, offset = 0x4, fixed_abs, tag = 'smem constant byte address 0x4 - core index']
  #allocation1 [shape = 'u32[144,128]{1,0:T(1,128)}', space=vmem, size = 0x12000, scoped, tag = 'internal scratch']
  #allocation2 [shape = 'f32[8,256]{1,0:T(8,128)}', space=vmem, size = 0x2000, scoped, tag = 'scratch operand']
  #allocation3 [shape = 'f32[1]{0:T(128)S(6)}', space=smem, size = 0x200, scoped, tag = 'scoped memory for tpu_custom_call.1']
  %s0 = inlined_call_operand.<no memory space> [shape: f32[1], index: 0, kind: input, shape index: {}]
  %s1 = inlined_call_operand.vmem [shape: f32[2,32], index: 1, kind: input, shape index: {}]
  %s2 = inlined_call_operand.hbm [shape: f32[2,32], index: 2, kind: input, shape index: {}]
  %s3 = inlined_call_operand.hbm [shape: f32[8,256], index: 3, kind: input, shape index: {}]
  %s4 = inlined_call_operand.hbm [shape: f32[8,256], index: 4, kind: input, shape index: {}]
  %s5 = inlined_call_operand.hbm [shape: f32[1,8,128], index: 5, kind: output, shape index: {}]
  %s6 = sld [smem:[#allocation0]]
  $region58: #{tpu_custom_call.1} parent=0
    _
  %s8 = ssub.s32 1, %s6
  %s9 = scalar_select 0, %s8, %s6
  %10 = sst [smem:[#allocation3]] %s0
  $region1: #{tpu_custom_call.1} parent=0
    #allocation4 [shape = 'u8[1024]{0}', space=vmem, size = 0x400, scoped, tag = 'input window, operand 2, single buffered']
    #allocation5 [shape = 's32[1]{0}', space=sflag, size = 0x4, scoped, tag = 'scoped memory for tpu_custom_call.1']
    #allocation6 [shape = 's32[1]{0}', space=sflag, size = 0x4, scoped, tag = 'scoped memory for tpu_custom_call.1']
    #allocation7 [shape = 'u8[8192]{0}', space=vmem, size = 0x2000, scoped, tag = 'input window, operand 3, single buffered']
    #allocation8 [shape = 's32[1]{0}', space=sflag, size = 0x4, scoped, tag = 'scoped memory for tpu_custom_call.1']
    #allocation9 [shape = 'u8[8192]{0}', space=vmem, size = 0x2000, scoped, tag = 'input window, operand 4, single buffered']
    #allocation10 [shape = 'u8[4096]{0}', space=vmem, size = 0x1000, scoped, tag = 'output window, operand 0, single buffered']
    %11 = vsyncpa [#allocation5], 0
    %12 = vsyncpa [#allocation8], 0
    %13 = vsyncpa [#allocation6], 0
    // Predicated region
    $region2: #{tpu_custom_call.1} parent=1 // pred_check
      _
    $region3: #{tpu_custom_call.1} parent=1 // pred_check_branch
      %15 = sbr.rel (0) target = $region5
    $region4: #{tpu_custom_call.1} parent=1 // pred_region
      _
    $region5: #{tpu_custom_call.1} parent=1 // pred_fallthru
      _
    // Predicated region
    $region6: #{tpu_custom_call.1} parent=1 // pred_check
      _
    $region7: #{tpu_custom_call.1} parent=1 // pred_check_branch
      %17 = sbr.rel (0) target = $region9
    $region8: #{tpu_custom_call.1} parent=1 // pred_region
      _
    $region9: #{tpu_custom_call.1} parent=1 // pred_fallthru
      _
    // Predicated region
    $region10: #{tpu_custom_call.1} parent=1 // pred_check
      _
    $region11: #{tpu_custom_call.1} parent=1 // pred_check_branch
      %19 = sbr.rel (0) target = $region13
    $region12: #{tpu_custom_call.1} parent=1 // pred_region
      %s21 = ssub.s32 32, 32
      %22 = vsyncadd [#allocation5], %s21
      %s24 = sshll.u32 [#allocation4], 4
      %s25 = int_to_ptr.vmem [resolvable:$true] %s24
      %27 = dma.hbm_to_vmem [thread:$0]  %s2, 32, %s25, [#allocation5]
    $region13: #{tpu_custom_call.1} parent=1 // pred_fallthru
      _
    // Predicated region
    $region14: #{tpu_custom_call.1} parent=1 // pred_check
      _
    $region15: #{tpu_custom_call.1} parent=1 // pred_check_branch
      %29 = sbr.rel (0) target = $region17
    $region16: #{tpu_custom_call.1} parent=1 // pred_region
      %s30 = sadd.s32 0, 0
      %s32 = ssub.s32 256, 256
      %33 = vsyncadd [#allocation8], %s32
      %s34 = smul.addr %s30, 2
      %s35 = smul.addr %s34, 128
      %s36 = scalar_lea.hbm %s3, %s35
      %s38 = sshll.u32 [#allocation7], 4
      %s39 = int_to_ptr.vmem [resolvable:$true] %s38
      %41 = dma.hbm_to_vmem [thread:$0]  %s36, 256, %s39, [#allocation8]
    $region17: #{tpu_custom_call.1} parent=1 // pred_fallthru
      _
    // Predicated region
    $region18: #{tpu_custom_call.1} parent=1 // pred_check
      _
    $region19: #{tpu_custom_call.1} parent=1 // pred_check_branch
      %43 = sbr.rel (0) target = $region21
    $region20: #{tpu_custom_call.1} parent=1 // pred_region
      %s44 = sadd.s32 0, 0
      %s46 = ssub.s32 256, 256
      %47 = vsyncadd [#allocation8], %s46
      %s48 = smul.addr %s44, 2
      %s49 = smul.addr %s48, 128
      %s50 = scalar_lea.hbm %s4, %s49
      %s52 = sshll.u32 [#allocation9], 4
      %s53 = int_to_ptr.vmem [resolvable:$true] %s52
      %55 = dma.hbm_to_vmem [thread:$0]  %s50, 256, %s53, [#allocation8]
    $region21: #{tpu_custom_call.1} parent=1 // pred_fallthru
      _
    // Predicated region
    $region22: #{tpu_custom_call.1} parent=1 // pred_check
      _
    $region23: #{tpu_custom_call.1} parent=1 // pred_check_branch
      %57 = sbr.rel (0) target = $region25
    $region24: #{tpu_custom_call.1} parent=1 // pred_region
      %58 = dma.done [#allocation5], 32
    $region25: #{tpu_custom_call.1} parent=1 // pred_fallthru
      _
    // Predicated region
    $region26: #{tpu_custom_call.1} parent=1 // pred_check
      _
    $region27: #{tpu_custom_call.1} parent=1 // pred_check_branch
      %60 = sbr.rel (0) target = $region29
    $region28: #{tpu_custom_call.1} parent=1 // pred_region
      %61 = dma.done [#allocation8], 256
    $region29: #{tpu_custom_call.1} parent=1 // pred_fallthru
      _
    // Predicated region
    $region30: #{tpu_custom_call.1} parent=1 // pred_check
      _
    $region31: #{tpu_custom_call.1} parent=1 // pred_check_branch
      %63 = sbr.rel (0) target = $region33
    $region32: #{tpu_custom_call.1} parent=1 // pred_region
      %64 = dma.done [#allocation8], 256
    $region33: #{tpu_custom_call.1} parent=1 // pred_fallthru
      _
    %s65 = sadd.s32 0, 0
    %s66 = sadd.s32 0, 0
    %p67 = scmp.eq.s32.totalorder 0, 0
    // Predicated region
    $region34: #{tpu_custom_call.1} parent=1 // pred_check
      %p68 = pneg %p67
    $region35: #{tpu_custom_call.1} parent=1 // pred_check_branch
      %70 = sbr.rel (%p68) target = $region37
    $region36: #{tpu_custom_call.1} parent=1 // pred_region
      %71 = vst [vmem:[#allocation2] sm:$0xff] 0.0
      %72 = vst [vmem:[#allocation2 + $0x8] sm:$0xff] 0.0
    $region37: #{tpu_custom_call.1} parent=1 // pred_fallthru
      _
    %v73 = vld [vmem:[#allocation9] sm:$0xff]
    %v74 = vld [vmem:[#allocation9 + $0x8] sm:$0xff]
    %v75 = vld [vmem:[#allocation7] sm:$0xff]
    %v76 = vld [vmem:[#allocation7 + $0x8] sm:$0xff]
    %v77 = vsub.f32 %v73, %v75
    %v78 = vsub.f32 %v74, %v76
    %v79 = vmul.f32 %v77, %v77
    %v80 = vmul.f32 %v78, %v78
    %v81 = vld [vmem:[#allocation2] sm:$0xff]
    %v82 = vld [vmem:[#allocation2 + $0x8] sm:$0xff]
    %v83 = vadd.f32 %v79, 0.0
    %v84 = vadd.f32 %v80, 0.0
    %v85 = vadd.f32 %v81, %v83
    %v86 = vadd.f32 %v82, %v84
    %87 = vst [vmem:[#allocation2] sm:$0xff] %v85
    %88 = vst [vmem:[#allocation2 + $0x8] sm:$0xff] %v86
    // Predicated region
    $region38: #{tpu_custom_call.1} parent=1 // pred_check
      %p89 = pneg %p67
    $region39: #{tpu_custom_call.1} parent=1 // pred_check_branch
      %91 = sbr.rel (%p89) target = $region41
    $region40: #{tpu_custom_call.1} parent=1 // pred_region
      %v92 = vld [vmem:[#allocation2] sm:$0xff]
      %v93 = vld [vmem:[#allocation2 + $0x8] sm:$0xff]
      %v94 = vadd.f32 %v92, %v93
      %95 = vadd.xlane.f32.xlu0 %v94
      %v96 = vpop.xlane.xlu0 %95
      %v97 = vrot.slane %v96, 4
      %v98 = vadd.f32 %v96, %v97
      %v99 = vrot.slane %v98, 2
      %v100 = vadd.f32 %v98, %v99
      %v101 = vrot.slane %v100, 1
      %v102 = vadd.f32 %v100, %v101
      %s103 = vtos %v102
      %v104 = vlaneseq
      %v105 = vand.u32 %v104, 127
      %p106 = scmp.eq.s32.totalorder 0, 0
      // Predicated region
      $region42: #{tpu_custom_call.1} parent=40 // pred_check
        %p107 = pneg %p106
      $region43: #{tpu_custom_call.1} parent=40 // pred_check_branch
        %109 = sbr.rel (%p107) target = $region45
      $region44: #{tpu_custom_call.1} parent=40 // pred_region
        %v110 = vld [vmem:[#allocation4] sm:$0x3]
        %v111 = vld [vmem:[%s1] sm:$0x3]
        %v112 = vmul.f32 %v110, %v110
        %v113 = vmul.f32 %v111, %v111
        %v114 = vadd.f32 %v112, %v113
        %v115 = vlog2.pop %v112
        %v116 = vmul.f32 %v115, 0.6931472
        %v117 = vsub.f32 %v114, %v116
        %v118 = vsub.f32 %v117, 0.5
        %vm119 = vcmask 254976
        %v120 = vsel %vm119, %v118, 0.0
        %121 = vadd.xlane.f32.xlu0 %v120
        %v122 = vpop.xlane.xlu0 %121
        %v123 = vrot.slane %v122, 4
        %v124 = vadd.f32 %v122, %v123
        %v125 = vrot.slane %v124, 2
        %v126 = vadd.f32 %v124, %v125
        %v127 = vrot.slane %v126, 1
        %v128 = vadd.f32 %v126, %v127
        %s129 = vtos %v128
        %s130 = sld [smem:[#allocation3]]
        %s131 = smul.f32 %s129, %s130
        %vm132 = vcmp.eq.s32.totalorder %v105, 0
        %vm133 = vcmp.eq.s32.totalorder %v105, 1
        %vm134 = vcmp.eq.s32.totalorder %v105, 2
        %s135 = sadd.f32 %s131, %s103
        %v136 = vstv %s135
        %v137 = vsel %vm134, %v136, 0.0
        %v138 = vstv %s103
        %v139 = vsel %vm133, %v138, %v137
        %v140 = vstv %s131
        %v141 = vsel %vm132, %v140, %v139
        %142 = vst [vmem:[#allocation10] sm:$0xff] %v141
      $region45: #{tpu_custom_call.1} parent=40 // pred_fallthru
        _
      %p143 = scmp.ne.s32.totalorder 0, 0
      // Predicated region
      $region46: #{tpu_custom_call.1} parent=40 // pred_check
        %p144 = pneg %p143
      $region47: #{tpu_custom_call.1} parent=40 // pred_check_branch
        %146 = sbr.rel (%p144) target = $region49
      $region48: #{tpu_custom_call.1} parent=40 // pred_region
        %vm147 = vcmp.eq.s32.totalorder %v105, 1
        %v148 = vstv %s103
        %v149 = vsel %vm147, %v148, 0.0
        %150 = vst [vmem:[#allocation10] sm:$0xff] %v149
      $region49: #{tpu_custom_call.1} parent=40 // pred_fallthru
        _
    $region41: #{tpu_custom_call.1} parent=1 // pred_fallthru
      _
    // Predicated region
    $region50: #{tpu_custom_call.1} parent=1 // pred_check
      _
    $region51: #{tpu_custom_call.1} parent=1 // pred_check_branch
      %152 = sbr.rel (0) target = $region53
    $region52: #{tpu_custom_call.1} parent=1 // pred_region
      %s154 = ssub.s32 128, 128
      %155 = vsyncadd [#allocation6], %s154
      %s157 = sshll.u32 [#allocation10], 4
      %s158 = int_to_ptr.vmem [resolvable:$true] %s157
      %160 = dma.vmem_to_hbm [thread:$0]  %s158, 128, %s5, [#allocation6]
    $region53: #{tpu_custom_call.1} parent=1 // pred_fallthru
      _
    // Predicated region
    $region54: #{tpu_custom_call.1} parent=1 // pred_check
      _
    $region55: #{tpu_custom_call.1} parent=1 // pred_check_branch
      %162 = sbr.rel (0) target = $region57
    $region56: #{tpu_custom_call.1} parent=1 // pred_region
      %163 = dma.done [#allocation6], 128
    $region57: #{tpu_custom_call.1} parent=1 // pred_fallthru
      _
    %164 = vsyncpa [#allocation5], 1
    %165 = vsyncpa [#allocation8], 1
    %166 = vsyncpa [#allocation6], 1

</llo_original>
